<compile_context>
chip_gen: v7x
topology: tpu7x:2x2x1
jax: 0.10.0
libtpu: 0.0.40
codegen_flags: <defaults>
</compile_context>

<pallas_src>
import functools

import jax
import jax.numpy as jnp
from jax import lax
from jax.experimental import pallas as pl
from jax.experimental.pallas import tpu as pltpu


def _iln2d_kernel(x_ref, gain_ref, bias_ref, o_ref, *, eps, n_elem):
    # x_ref block: (1, C, TH, W). Each h-row (sublane) is an independent group;
    # statistics reduce over C (axis 1) and W (axis 3).
    x = x_ref[...].astype(jnp.float32)

    # Pass 1: mean.  Lane (W) reduce on the XLU, then C reduce on the VPU.
    s = jnp.sum(jnp.sum(x, axis=3, keepdims=True), axis=1, keepdims=True)  # (1,1,TH,1)
    mean = s * jnp.float32(1.0 / n_elem)

    # Pass 2 (block already VMEM-resident; extra pass hidden under HBM DMA):
    # centered sum of squares -> unbiased variance (torch.std default).
    d = x - mean
    ss = jnp.sum(jnp.sum(d * d, axis=3, keepdims=True), axis=1, keepdims=True)
    var = ss * jnp.float32(1.0 / (n_elem - 1))
    std = jnp.sqrt(var)

    # Module computes (std + eps).pow(0.5) in the denominator; do 1/sqrt via
    # rsqrt on the tiny (TH,) stats tensor (EUP), then a single multiply.
    inv = lax.rsqrt(std + jnp.float32(eps))                                # (1,1,TH,1)

    gain = gain_ref[...].astype(jnp.float32)                               # (1,C,1,W)
    bias = bias_ref[...].astype(jnp.float32)                               # (1,C,1,W)

    o_ref[...] = (d * inv * gain + bias).astype(o_ref.dtype)


def instant_layer_norm_2d(x, gain, bias, eps=1e-5, *, target_block_bytes=4 << 20):
    """x: (N, C, H, W); gain, bias: (1, C, 1, 1). Returns (N, C, H, W)."""
    N, C, H, W = x.shape
    n_elem = C * W
    # TODO(synk): C*W == 1 divides by zero in the unbiased-variance divisor
    # (same NaN behavior as torch.std); not guarded here.

    itemsize = x.dtype.itemsize
    # Budget TH against the larger of the input dtype and the in-kernel f32
    # upcast so bf16 inputs don't blow the VMEM estimate.
    row_bytes = C * W * max(itemsize, 4)
    th = max(1, target_block_bytes // max(row_bytes, 1))

    # Keep at least ~4 total grid steps when the problem allows it, so the
    # pipeline has work to overlap and v7x's two TensorCores can both be fed
    # over the "parallel" axes.
    min_steps = 4
    steps_per_n = -(-min_steps // max(N, 1))          # ceil(min_steps / N)
    th = min(th, -(-H // steps_per_n))                # ceil(H / steps_per_n)

    if th >= H:
        th = H                                        # full-extent block is always legal
    else:
        th = max(8, (th // 8) * 8)                    # sublane-aligned sub-blocks
        if th >= H:
            th = H

    grid = (N, pl.cdiv(H, th))

    # gain/bias: (1, C, 1, 1) -> (1, C, 1, W) (tiny; lane dim dense in-kernel).
    gain_b = jnp.broadcast_to(gain.astype(x.dtype), (1, C, 1, W))
    bias_b = jnp.broadcast_to(bias.astype(x.dtype), (1, C, 1, W))

    # VMEM: double-buffered in + out blocks, plus a few f32 block temporaries
    # and the (tiny) params; 1.5x headroom, capped well under v7x's 64 MiB.
    blk_elems = C * th * W
    vmem_need = 4 * blk_elems * itemsize + 4 * blk_elems * 4 + 2 * C * W * 4
    vmem_limit = int(min(56 * 1024 * 1024,
                         max(16 * 1024 * 1024, vmem_need + vmem_need // 2)))

    cost = pl.CostEstimate(
        flops=8 * N * C * H * W,
        transcendentals=2 * N * H,                    # sqrt + rsqrt per (n, h) row
        bytes_accessed=2 * N * C * H * W * itemsize + 2 * C * W * itemsize,
    )

    kernel = functools.partial(_iln2d_kernel, eps=eps, n_elem=n_elem)

    return pl.pallas_call(
        kernel,
        out_shape=jax.ShapeDtypeStruct((N, C, H, W), x.dtype),
        grid_spec=pltpu.PrefetchScalarGridSpec(
            num_scalar_prefetch=0,
            grid=grid,
            in_specs=[
                pl.BlockSpec((1, C, th, W), lambda n, h: (n, 0, h, 0)),
                pl.BlockSpec((1, C, 1, W), lambda n, h: (0, 0, 0, 0)),
                pl.BlockSpec((1, C, 1, W), lambda n, h: (0, 0, 0, 0)),
            ],
            out_specs=pl.BlockSpec((1, C, th, W), lambda n, h: (n, 0, h, 0)),
        ),
        compiler_params=pltpu.CompilerParams(
            dimension_semantics=("parallel", "parallel"),
            vmem_limit_bytes=vmem_limit,
        ),
        cost_estimate=cost,
    )(x, gain_b, bias_b)


def _reference(x, gain, bias, eps=1e-5):
    """Plain-JAX mirror of the PyTorch forward (two-pass, exact division)."""
    x32 = x.astype(jnp.float32)
    mean = jnp.mean(x32, axis=(1, 3), keepdims=True)
    c, w = x.shape[1], x.shape[3]
    var = jnp.sum((x32 - mean) ** 2, axis=(1, 3), keepdims=True) / (c * w - 1)
    std = jnp.sqrt(var)
    y = (x32 - mean) / jnp.sqrt(std + eps)
    return (y * gain + bias).astype(x.dtype)


if __name__ == "__main__":
    # Module config: InstantLayerNorm2d(num_features=C, affine=True, eps=1e-5)
    N, C, H, W = 2, 4, 16, 16
    eps = 1e-5

    key = jax.random.PRNGKey(0)
    kx, kg, kb = jax.random.split(key, 3)
    x = jax.random.normal(kx, (N, C, H, W), dtype=jnp.float32)

    # Deterministic parameter init (as in __init__): ones gain, zeros bias.
    gain = jnp.ones((1, C, 1, 1), dtype=jnp.float32)
    bias = jnp.zeros((1, C, 1, 1), dtype=jnp.float32)

    out = jax.block_until_ready(instant_layer_norm_2d(x, gain, bias, eps=eps))
    ref = _reference(x, gain, bias, eps=eps)
    assert out.shape == (N, C, H, W)
    assert jnp.allclose(out, ref, atol=1e-4, rtol=1e-4)

    # Extra check exercising the affine broadcast with non-trivial gain/bias,
    # plus an input with a large DC offset to stress the statistics path.
    gain2 = jax.random.normal(kg, (1, C, 1, 1), dtype=jnp.float32)
    bias2 = jax.random.normal(kb, (1, C, 1, 1), dtype=jnp.float32)
    x2 = x + 100.0
    out2 = jax.block_until_ready(instant_layer_norm_2d(x2, gain2, bias2, eps=eps))
    ref2 = _reference(x2, gain2, bias2, eps=eps)
    assert jnp.allclose(out2, ref2, atol=1e-4, rtol=1e-4)

    print("KERNEL_OK")
</pallas_src>

<mosaic_0001>
module attributes {stable_mosaic.version = 11 : i64} {
  func.func @_iln2d_kernel(%arg0: i32, %arg1: i32, %arg2: memref<1x4x8x16xf32, #tpu.memory_space<vmem>>, %arg3: memref<1x4x1x16xf32, #tpu.memory_space<vmem>>, %arg4: memref<1x4x1x16xf32, #tpu.memory_space<vmem>>, %arg5: memref<1x4x8x16xf32, #tpu.memory_space<vmem>>) attributes {dimension_semantics = [#tpu.dimension_semantics<parallel>, #tpu.dimension_semantics<parallel>], iteration_bounds = array<i64: 2, 2>, scalar_prefetch = 0 : i64, scratch_operands = 0 : i64, tpu.core_type = #tpu.core_type<tc>, window_params = [{transform_indices = @transform_0, window_bounds = array<i64: 1, 4, 8, 16>}, {pipeline_mode = #tpu.pipeline_mode<synchronous>, transform_indices = @transform_1, window_bounds = array<i64: 1, 4, 1, 16>}, {pipeline_mode = #tpu.pipeline_mode<synchronous>, transform_indices = @transform_2, window_bounds = array<i64: 1, 4, 1, 16>}, {transform_indices = @transform_3, window_bounds = array<i64: 1, 4, 8, 16>}]} {
    %c0 = arith.constant 0 : index
    %c0_0 = arith.constant 0 : index
    %c0_1 = arith.constant 0 : index
    %c0_2 = arith.constant 0 : index
    %0 = vector.load %arg2[%c0, %c0_0, %c0_1, %c0_2] : memref<1x4x8x16xf32, #tpu.memory_space<vmem>>, vector<1x4x8x16xf32>
    %cst = arith.constant dense<0.000000e+00> : vector<1x4x8xf32>
    %1 = vector.multi_reduction <add>, %0, %cst [3] : vector<1x4x8x16xf32> to vector<1x4x8xf32>
    %2 = vector.shape_cast %1 : vector<1x4x8xf32> to vector<1x4x8x1xf32>
    %cst_3 = arith.constant dense<0.000000e+00> : vector<1x8x1xf32>
    %3 = vector.multi_reduction <add>, %2, %cst_3 [1] : vector<1x4x8x1xf32> to vector<1x8x1xf32>
    %4 = vector.shape_cast %3 : vector<1x8x1xf32> to vector<1x1x8x1xf32>
    %cst_4 = arith.constant 1.562500e-02 : f32
    %5 = vector.broadcast %cst_4 : f32 to vector<1x1x8x1xf32>
    %6 = arith.mulf %4, %5 : vector<1x1x8x1xf32>
    %7 = vector.broadcast %6 : vector<1x1x8x1xf32> to vector<1x4x8x16xf32>
    %8 = arith.subf %0, %7 : vector<1x4x8x16xf32>
    %9 = arith.mulf %8, %8 : vector<1x4x8x16xf32>
    %cst_5 = arith.constant dense<0.000000e+00> : vector<1x4x8xf32>
    %10 = vector.multi_reduction <add>, %9, %cst_5 [3] : vector<1x4x8x16xf32> to vector<1x4x8xf32>
    %11 = vector.shape_cast %10 : vector<1x4x8xf32> to vector<1x4x8x1xf32>
    %cst_6 = arith.constant dense<0.000000e+00> : vector<1x8x1xf32>
    %12 = vector.multi_reduction <add>, %11, %cst_6 [1] : vector<1x4x8x1xf32> to vector<1x8x1xf32>
    %13 = vector.shape_cast %12 : vector<1x8x1xf32> to vector<1x1x8x1xf32>
    %cst_7 = arith.constant 0.0158730168 : f32
    %14 = vector.broadcast %cst_7 : f32 to vector<1x1x8x1xf32>
    %15 = arith.mulf %13, %14 : vector<1x1x8x1xf32>
    %16 = math.sqrt %15 : vector<1x1x8x1xf32>
    %cst_8 = arith.constant 9.99999974E-6 : f32
    %17 = vector.broadcast %cst_8 : f32 to vector<1x1x8x1xf32>
    %18 = arith.addf %16, %17 : vector<1x1x8x1xf32>
    %19 = math.rsqrt %18 : vector<1x1x8x1xf32>
    %c0_9 = arith.constant 0 : index
    %c0_10 = arith.constant 0 : index
    %c0_11 = arith.constant 0 : index
    %c0_12 = arith.constant 0 : index
    %20 = vector.load %arg3[%c0_9, %c0_10, %c0_11, %c0_12] : memref<1x4x1x16xf32, #tpu.memory_space<vmem>>, vector<1x4x1x16xf32>
    %c0_13 = arith.constant 0 : index
    %c0_14 = arith.constant 0 : index
    %c0_15 = arith.constant 0 : index
    %c0_16 = arith.constant 0 : index
    %21 = vector.load %arg4[%c0_13, %c0_14, %c0_15, %c0_16] : memref<1x4x1x16xf32, #tpu.memory_space<vmem>>, vector<1x4x1x16xf32>
    %22 = vector.broadcast %19 : vector<1x1x8x1xf32> to vector<1x4x8x16xf32>
    %23 = arith.mulf %8, %22 : vector<1x4x8x16xf32>
    %24 = vector.broadcast %20 : vector<1x4x1x16xf32> to vector<1x4x8x16xf32>
    %25 = arith.mulf %23, %24 : vector<1x4x8x16xf32>
    %26 = vector.broadcast %21 : vector<1x4x1x16xf32> to vector<1x4x8x16xf32>
    %27 = arith.addf %25, %26 : vector<1x4x8x16xf32>
    %c0_17 = arith.constant 0 : index
    %c0_18 = arith.constant 0 : index
    %c0_19 = arith.constant 0 : index
    %c0_20 = arith.constant 0 : index
    %28 = vector.load %arg5[%c0_17, %c0_18, %c0_19, %c0_20] : memref<1x4x8x16xf32, #tpu.memory_space<vmem>>, vector<1x4x8x16xf32>
    tpu.vector_store %arg5[%c0_17, %c0_18, %c0_19, %c0_20], %27 {strides = array<i32>} : memref<1x4x8x16xf32, #tpu.memory_space<vmem>>, vector<1x4x8x16xf32>,
    return
  }
  func.func @transform_0(%arg0: i32, %arg1: i32) -> (i32, i32, i32, i32) {
    %c0_i32 = arith.constant 0 : i32
    %c0_i32_0 = arith.constant 0 : i32
    %c0_i32_1 = arith.constant 0 : i32
    return %arg0, %c0_i32, %arg1, %c0_i32_0 : i32, i32, i32, i32
  }
  func.func @transform_1(%arg0: i32, %arg1: i32) -> (i32, i32, i32, i32) {
    %c0_i32 = arith.constant 0 : i32
    %c0_i32_0 = arith.constant 0 : i32
    %c0_i32_1 = arith.constant 0 : i32
    %c0_i32_2 = arith.constant 0 : i32
    %c0_i32_3 = arith.constant 0 : i32
    return %c0_i32, %c0_i32_0, %c0_i32_1, %c0_i32_2 : i32, i32, i32, i32
  }
  func.func @transform_2(%arg0: i32, %arg1: i32) -> (i32, i32, i32, i32) {
    %c0_i32 = arith.constant 0 : i32
    %c0_i32_0 = arith.constant 0 : i32
    %c0_i32_1 = arith.constant 0 : i32
    %c0_i32_2 = arith.constant 0 : i32
    %c0_i32_3 = arith.constant 0 : i32
    return %c0_i32, %c0_i32_0, %c0_i32_1, %c0_i32_2 : i32, i32, i32, i32
  }
  func.func @transform_3(%arg0: i32, %arg1: i32) -> (i32, i32, i32, i32) {
    %c0_i32 = arith.constant 0 : i32
    %c0_i32_0 = arith.constant 0 : i32
    %c0_i32_1 = arith.constant 0 : i32
    return %arg0, %c0_i32, %arg1, %c0_i32_0 : i32, i32, i32, i32
  }
}

</mosaic_0001>

<llo_original>
// kernel: tpu_custom_call.1
$region0: #{tpu_custom_call.1}
  #allocation0 [shape = 'u32[]', space=smem, size = 0x4, offset = 0x4, fixed_abs, tag = 'smem constant byte address 0x4 - core index']
  #allocation1 [shape = 'u32[144,128]{1,0:T(1,128)}', space=vmem, size = 0x12000, scoped, tag = 'internal scratch']
  %s0 = inlined_call_operand.hbm [shape: f32[2,4,16,16], index: 0, kind: input, shape index: {}]
  %s1 = inlined_call_operand.hbm [shape: f32[1,4,1,16], index: 1, kind: input, shape index: {}]
  %s2 = inlined_call_operand.vmem [shape: f32[1,4,1,16], index: 2, kind: input, shape index: {}]
  %s3 = inlined_call_operand.hbm [shape: f32[2,4,16,16], index: 3, kind: output, shape index: {}]
  %s4 = sld [smem:[#allocation0]]
  $region53: #{tpu_custom_call.1} parent=0
    _
  %s6 = ssub.s32 1, %s4
  %s7 = scalar_select 0, %s6, %s4
  $region1: #{tpu_custom_call.1} parent=0
    #allocation2 [shape = 'u8[32768]{0}', space=vmem, size = 0x8000, scoped, tag = 'input window, operand 0']
    #allocation3 [shape = 's32[2]{0}', space=sflag, size = 0x8, scoped, tag = 'scoped memory for tpu_custom_call.1']
    #allocation4 [shape = 's32[2]{0}', space=sflag, size = 0x8, scoped, tag = 'scoped memory for tpu_custom_call.1']
    #allocation5 [shape = 'u8[2048]{0}', space=vmem, size = 0x800, scoped, tag = 'input window, operand 1, single buffered']
    #allocation6 [shape = 's32[1]{0}', space=sflag, size = 0x4, scoped, tag = 'scoped memory for tpu_custom_call.1']
    #allocation7 [shape = 'u8[32768]{0}', space=vmem, size = 0x8000, scoped, tag = 'output window, operand 0']
    %8 = vsyncpa [#allocation3], 0
    %s9 = scalar_lea.sflag [#allocation3], 1
    %10 = vsyncpa %s9, 0
    %11 = vsyncpa [#allocation6], 0
    %12 = vsyncpa [#allocation4], 0
    %s13 = scalar_lea.sflag [#allocation4], 1
    %14 = vsyncpa %s13, 0
    loop: start=0, step=1, limit=6
    $region2: #{tpu_custom_call.1} parent=1 // loop_pre_header
      _
    $region3: #{tpu_custom_call.1} parent=1 // loop_header
      %s16 = sphi 0, %s20
      %p17 = scmp.ge.s32.totalorder %s16, 6
      %s23 = sphi 0, %s35
      %s24 = sphi 0, %s31
      %s25 = sphi 0, %s23
      %s26 = sphi 0, %s24
      %s27 = sphi 0, %s25
      %s28 = sphi 0, %s26
      %s40 = sphi 0, %s42
      %s43 = sphi 0, %s40
      %s44 = sphi 0, %s43
      %s60 = sphi 0, %s44
      %s64 = sphi 0, %s64
      %s66 = sphi 0, %s64
      %s67 = sphi 0, %s66
      %s81 = sphi 0, %s67
      %s85 = sphi 0, %s85
      %s87 = sphi 0, %s85
      %s88 = sphi 0, %s87
      %s102 = sphi 0, %s88
      %s110 = sphi 0, %s112
      %s113 = sphi 0, %s110
      %s114 = sphi 0, %s113
      %s130 = sphi 0, %s114
    $region4: #{tpu_custom_call.1} parent=1 // loop_header_branch
      %19 = sbr.rel (%p17) target = $region8
    $region5: #{tpu_custom_call.1} parent=1 // loop_body
      %s21 = ssub.s32 %s16, 1
      %s22 = ssub.s32 %s16, 2
      %s29 = sadd.s32 1, %s24
      %p30 = scmp.ge.s32.totalorder %s29, 2
      %s31 = scalar_select %p30, 0, %s29
      %s32 = sadd.s32 1, %s23
      %s33 = scalar_select %p30, %s32, %s23
      %p34 = scmp.ge.s32.totalorder %s33, 2
      %s35 = scalar_select %p34, 0, %s33
      %s36 = ssub.s32 %s23, %s35
      %s37 = ssub.s32 %s24, %s31
      %s38 = sor.u32 %s36, %s37
      %p39 = scmp.eq.s32.totalorder %s38, 0
      %s41 = sadd.s32 %s40, 1
      %s42 = scalar_select %p39, %s40, %s41
      %p45 = pneg %p39
      %p46 = scmp.eq.s32.totalorder %s16, 3
      %p47 = por %p45, %p46
      %p48 = scmp.ne.s32.totalorder %s40, %s43
      %p49 = scmp.eq.s32.totalorder %s16, 0
      %p50 = por %p48, %p49
      %p51 = scmp.ne.s32.totalorder %s40, %s43
      %p52 = scmp.eq.s32.totalorder %s21, 3
      %p53 = por %p51, %p52
      %p54 = scmp.ne.s32.totalorder %s43, %s44
      %p55 = scmp.eq.s32.totalorder %s21, 0
      %p56 = por %p54, %p55
      %p57 = scmp.ne.s32.totalorder %s43, %s44
      %p58 = scmp.eq.s32.totalorder %s22, 3
      %p59 = por %p57, %p58
      %p61 = scmp.ne.s32.totalorder %s44, %s60
      %p62 = scmp.eq.s32.totalorder %s22, 0
      %p63 = por %p61, %p62
      %s65 = sadd.s32 %s64, 1
      %p68 = scmp.eq.s32.totalorder %s16, 3
      %p69 = scmp.ne.s32.totalorder %s64, %s66
      %p70 = scmp.eq.s32.totalorder %s16, 0
      %p71 = por %p69, %p70
      %p72 = scmp.ne.s32.totalorder %s64, %s66
      %p73 = scmp.eq.s32.totalorder %s21, 3
      %p74 = por %p72, %p73
      %p75 = scmp.ne.s32.totalorder %s66, %s67
      %p76 = scmp.eq.s32.totalorder %s21, 0
      %p77 = por %p75, %p76
      %p78 = scmp.ne.s32.totalorder %s66, %s67
      %p79 = scmp.eq.s32.totalorder %s22, 3
      %p80 = por %p78, %p79
      %p82 = scmp.ne.s32.totalorder %s67, %s81
      %p83 = scmp.eq.s32.totalorder %s22, 0
      %p84 = por %p82, %p83
      %s86 = sadd.s32 %s85, 1
      %p89 = scmp.eq.s32.totalorder %s16, 3
      %p90 = scmp.ne.s32.totalorder %s85, %s87
      %p91 = scmp.eq.s32.totalorder %s16, 0
      %p92 = por %p90, %p91
      %p93 = scmp.ne.s32.totalorder %s85, %s87
      %p94 = scmp.eq.s32.totalorder %s21, 3
      %p95 = por %p93, %p94
      %p96 = scmp.ne.s32.totalorder %s87, %s88
      %p97 = scmp.eq.s32.totalorder %s21, 0
      %p98 = por %p96, %p97
      %p99 = scmp.ne.s32.totalorder %s87, %s88
      %p100 = scmp.eq.s32.totalorder %s22, 3
      %p101 = por %p99, %p100
      %p103 = scmp.ne.s32.totalorder %s88, %s102
      %p104 = scmp.eq.s32.totalorder %s22, 0
      %p105 = por %p103, %p104
      %s106 = ssub.s32 %s23, %s35
      %s107 = ssub.s32 %s24, %s31
      %s108 = sor.u32 %s106, %s107
      %p109 = scmp.eq.s32.totalorder %s108, 0
      %s111 = sadd.s32 %s110, 1
      %s112 = scalar_select %p109, %s110, %s111
      %p115 = pneg %p109
      %p116 = scmp.eq.s32.totalorder %s16, 3
      %p117 = por %p115, %p116
      %p118 = scmp.ne.s32.totalorder %s110, %s113
      %p119 = scmp.eq.s32.totalorder %s16, 0
      %p120 = por %p118, %p119
      %p121 = scmp.ne.s32.totalorder %s110, %s113
      %p122 = scmp.eq.s32.totalorder %s21, 3
      %p123 = por %p121, %p122
      %p124 = scmp.ne.s32.totalorder %s113, %s114
      %p125 = scmp.eq.s32.totalorder %s21, 0
      %p126 = por %p124, %p125
      %p127 = scmp.ne.s32.totalorder %s113, %s114
      %p128 = scmp.eq.s32.totalorder %s22, 3
      %p129 = por %p127, %p128
      %p131 = scmp.ne.s32.totalorder %s114, %s130
      %p132 = scmp.eq.s32.totalorder %s22, 0
      %p133 = por %p131, %p132
      %p134 = scmp.le.s32.totalorder 1, %s16
      %p135 = scmp.lt.s32.totalorder %s16, 5
      %p136 = pnand %p134, %p135
      %p137 = pneg %p136
      // Predicated region
      $region9: #{tpu_custom_call.1} parent=5 // pred_check
        _
      $region10: #{tpu_custom_call.1} parent=5 // pred_check_branch
        %139 = sbr.rel (%p136) target = $region12
      $region11: #{tpu_custom_call.1} parent=5 // pred_region
        %s140 = ssub.s32 %s16, 1
        // Predicated region
        $region13: #{tpu_custom_call.1} parent=11 // pred_check
          %p141 = pneg %p77
        $region14: #{tpu_custom_call.1} parent=11 // pred_check_branch
          %143 = sbr.rel (%p141) target = $region16
        $region15: #{tpu_custom_call.1} parent=11 // pred_region
          %s145 = ssub.s32 64, 64
          %146 = vsyncadd [#allocation6], %s145
          %s147 = sshll.u32 [#allocation5], 4
          %s148 = int_to_ptr.vmem [resolvable:$true] %s147
          %153 = dma.hbm_to_vmem [thread:$0]  %s1, 64, %s148, [#allocation6], 16, 16, 1
        $region16: #{tpu_custom_call.1} parent=11 // pred_fallthru
          _
        // Predicated region
        $region17: #{tpu_custom_call.1} parent=11 // pred_check
          %p154 = pneg %p98
        $region18: #{tpu_custom_call.1} parent=11 // pred_check_branch
          %156 = sbr.rel (%p154) target = $region20
        $region19: #{tpu_custom_call.1} parent=11 // pred_region
          _
        $region20: #{tpu_custom_call.1} parent=11 // pred_fallthru
          _
      $region12: #{tpu_custom_call.1} parent=5 // pred_fallthru
        _
      %p157 = scmp.lt.s32.totalorder %s16, 4
      // Predicated region
      $region21: #{tpu_custom_call.1} parent=5 // pred_check
        %p158 = pneg %p157
      $region22: #{tpu_custom_call.1} parent=5 // pred_check_branch
        %160 = sbr.rel (%p158) target = $region24
      $region23: #{tpu_custom_call.1} parent=5 // pred_region
        // Predicated region
        $region25: #{tpu_custom_call.1} parent=23 // pred_check
          %p161 = pneg %p50
        $region26: #{tpu_custom_call.1} parent=23 // pred_check_branch
          %163 = sbr.rel (%p161) target = $region28
        $region27: #{tpu_custom_call.1} parent=23 // pred_region
          %s164 = sand.u32 %s40, 1
          %s165 = scalar_lea.sflag [#allocation3], %s164
          %s166 = sand.u32 %s40, 1
          %s167 = smul.addr %s166, 32
          %s168 = scalar_lea.vmem [#allocation2], %s167
          %s170 = ssub.s32 512, 512
          %171 = vsyncadd %s165, %s170
          %s172 = smul.addr %s23, 8
          %s173 = sadd.s32 %s24, %s172
          %s174 = smul.addr %s173, 128
          %s175 = scalar_lea.hbm %s0, %s174
          %s176 = sshll.u32 %s168, 4
          %s177 = int_to_ptr.vmem [resolvable:$true] %s176
          %182 = dma.hbm_to_vmem [thread:$0]  %s175, 512, %s177, %s165, 256, 128, 8
        $region28: #{tpu_custom_call.1} parent=23 // pred_fallthru
          _
      $region24: #{tpu_custom_call.1} parent=5 // pred_fallthru
        _
      %p183 = scmp.le.s32.totalorder 1, %s16
      %p184 = scmp.lt.s32.totalorder %s16, 5
      %p185 = pnand %p183, %p184
      %p186 = pneg %p185
      // Predicated region
      $region29: #{tpu_custom_call.1} parent=5 // pred_check
        _
      $region30: #{tpu_custom_call.1} parent=5 // pred_check_branch
        %188 = sbr.rel (%p185) target = $region32
      $region31: #{tpu_custom_call.1} parent=5 // pred_region
        %s189 = ssub.s32 %s16, 1
        %s190 = sand.u32 %s43, 1
        %s191 = scalar_lea.sflag [#allocation3], %s190
        %s192 = sand.u32 %s43, 1
        %s193 = smul.addr %s192, 32
        %s194 = scalar_lea.vmem [#allocation2], %s193
        // Predicated region
        $region33: #{tpu_custom_call.1} parent=31 // pred_check
          %p195 = pneg %p56
        $region34: #{tpu_custom_call.1} parent=31 // pred_check_branch
          %197 = sbr.rel (%p195) target = $region36
        $region35: #{tpu_custom_call.1} parent=31 // pred_region
          %198 = dma.done %s191, 512
        $region36: #{tpu_custom_call.1} parent=31 // pred_fallthru
          _
        // Predicated region
        $region37: #{tpu_custom_call.1} parent=31 // pred_check
          %p199 = pneg %p77
        $region38: #{tpu_custom_call.1} parent=31 // pred_check_branch
          %201 = sbr.rel (%p199) target = $region40
        $region39: #{tpu_custom_call.1} parent=31 // pred_region
          %202 = dma.done [#allocation6], 64
        $region40: #{tpu_custom_call.1} parent=31 // pred_fallthru
          _
        %s203 = sand.u32 %s43, 1
        %s204 = scalar_lea.sflag [#allocation3], %s203
        %s205 = sand.u32 %s43, 1
        %s206 = smul.addr %s205, 32
        %s207 = scalar_lea.vmem [#allocation2], %s206
        %p208 = pneg %p56
        %p209 = pneg %p53
        %p210 = pneg %p77
        %p211 = pneg %p74
        %p212 = pneg %p98
        %p213 = pneg %p95
        %p214 = pneg %p126
        %p215 = pneg %p123
        %s216 = sand.u32 %s113, 1
        %s217 = scalar_lea.sflag [#allocation4], %s216
        %s218 = sand.u32 %s113, 1
        %s219 = smul.addr %s218, 32
        %s220 = scalar_lea.vmem [#allocation7], %s219
        %v221 = vld [vmem:[%s194] sm:$0xff]
        %v222 = vld [vmem:[%s194 + $0x8] sm:$0xff]
        %v223 = vld [vmem:[%s194 + $0x10] sm:$0xff]
        %v224 = vld [vmem:[%s194 + $0x18] sm:$0xff]
        %vm225 = vcmask 130048
        %v226 = vsel %vm225, %v221, 0.0
        %227 = vadd.xlane.f32.xlu0 %v226
        %v228 = vpop.xlane.xlu0 %227
        %v229 = vsel %vm225, %v222, 0.0
        %230 = vadd.xlane.f32.xlu0 %v229
        %v231 = vpop.xlane.xlu0 %230
        %v232 = vsel %vm225, %v223, 0.0
        %233 = vadd.xlane.f32.xlu0 %v232
        %v234 = vpop.xlane.xlu0 %233
        %v235 = vsel %vm225, %v224, 0.0
        %236 = vadd.xlane.f32.xlu0 %v235
        %v237 = vpop.xlane.xlu0 %236
        %v238 = vadd.f32 %v228, %v231
        %v239 = vadd.f32 %v238, %v234
        %v240 = vadd.f32 %v239, %v237
        %v241 = vmul.f32 %v240, 0.015625
        %v242 = vsub.f32 %v221, %v241
        %v243 = vsub.f32 %v222, %v241
        %v244 = vsub.f32 %v223, %v241
        %v245 = vsub.f32 %v224, %v241
        %v246 = vmul.f32 %v242, %v242
        %v247 = vmul.f32 %v243, %v243
        %v248 = vmul.f32 %v244, %v244
        %v249 = vmul.f32 %v245, %v245
        %v250 = vsel %vm225, %v246, 0.0
        %251 = vadd.xlane.f32.xlu0 %v250
        %v252 = vpop.xlane.xlu0 %251
        %v253 = vsel %vm225, %v247, 0.0
        %254 = vadd.xlane.f32.xlu0 %v253
        %v255 = vpop.xlane.xlu0 %254
        %v256 = vsel %vm225, %v248, 0.0
        %257 = vadd.xlane.f32.xlu0 %v256
        %v258 = vpop.xlane.xlu0 %257
        %v259 = vsel %vm225, %v249, 0.0
        %260 = vadd.xlane.f32.xlu0 %v259
        %v261 = vpop.xlane.xlu0 %260
        %v262 = vadd.f32 %v252, %v255
        %v263 = vadd.f32 %v262, %v258
        %v264 = vadd.f32 %v263, %v261
        %v265 = vmul.f32 %v264, 0.015873017
        %v266 = vrsqrt.pop %v265
        %v267 = vmul.f32 %v265, %v266
        %vm268 = vcmp.eq.f32.partialorder %v265, inf
        %v269 = vsel %vm268, %v265, %v267
        %vm270 = vcmp.eq.f32.partialorder %v265, 0.0
        %v271 = vand.u32 %v265, 2147483648
        %v272 = vsel %vm270, %v271, %v269
        %v273 = vadd.f32 %v272, 1e-05
        %v274 = vrsqrt.pop %v273
        %v275 = vld [vmem:[#allocation5] sm:$0x1]
        %v276 = vld [vmem:[#allocation5 + $0x1] sm:$0x1]
        %v277 = vld [vmem:[#allocation5 + $0x2] sm:$0x1]
        %v278 = vld [vmem:[#allocation5 + $0x3] sm:$0x1]
        %v279 = vld [vmem:[%s2] sm:$0x1]
        %v280 = vld [vmem:[%s2 + $0x1] sm:$0x1]
        %v281 = vld [vmem:[%s2 + $0x2] sm:$0x1]
        %v282 = vld [vmem:[%s2 + $0x3] sm:$0x1]
        %v283 = vmul.f32 %v242, %v274
        %v284 = vmul.f32 %v243, %v274
        %v285 = vmul.f32 %v244, %v274
        %v286 = vmul.f32 %v245, %v274
        %v291 = vlaneseq
        %v292 = vshrl.u32 %v291, 7
        %v293 = vsub.s32 0, %v292
        %v294 = vrot.slane %v275, %v293
        %v295 = vlaneseq
        %v296 = vshrl.u32 %v295, 7
        %v297 = vsub.s32 0, %v296
        %v298 = vrot.slane %v276, %v297
        %v299 = vlaneseq
        %v300 = vshrl.u32 %v299, 7
        %v301 = vsub.s32 0, %v300
        %v302 = vrot.slane %v277, %v301
        %v303 = vlaneseq
        %v304 = vshrl.u32 %v303, 7
        %v305 = vsub.s32 0, %v304
        %v306 = vrot.slane %v278, %v305
        %v311 = vmul.f32 %v283, %v294
        %v312 = vmul.f32 %v284, %v298
        %v313 = vmul.f32 %v285, %v302
        %v314 = vmul.f32 %v286, %v306
        %v319 = vlaneseq
        %v320 = vshrl.u32 %v319, 7
        %v321 = vsub.s32 0, %v320
        %v322 = vrot.slane %v279, %v321
        %v323 = vlaneseq
        %v324 = vshrl.u32 %v323, 7
        %v325 = vsub.s32 0, %v324
        %v326 = vrot.slane %v280, %v325
        %v327 = vlaneseq
        %v328 = vshrl.u32 %v327, 7
        %v329 = vsub.s32 0, %v328
        %v330 = vrot.slane %v281, %v329
        %v331 = vlaneseq
        %v332 = vshrl.u32 %v331, 7
        %v333 = vsub.s32 0, %v332
        %v334 = vrot.slane %v282, %v333
        %v339 = vadd.f32 %v311, %v322
        %v340 = vadd.f32 %v312, %v326
        %v341 = vadd.f32 %v313, %v330
        %v342 = vadd.f32 %v314, %v334
        %343 = vst.msk [vmem:[%s220] sm:$0xff] %vm225, %v339
        %344 = vst.msk [vmem:[%s220 + $0x8] sm:$0xff] %vm225, %v340
        %345 = vst.msk [vmem:[%s220 + $0x10] sm:$0xff] %vm225, %v341
        %346 = vst.msk [vmem:[%s220 + $0x18] sm:$0xff] %vm225, %v342
        %s347 = sand.u32 %s113, 1
        %s348 = scalar_lea.sflag [#allocation4], %s347
        %s349 = sand.u32 %s113, 1
        %s350 = smul.addr %s349, 32
        %s351 = scalar_lea.vmem [#allocation7], %s350
        // Predicated region
        $region41: #{tpu_custom_call.1} parent=31 // pred_check
          %p352 = pneg %p123
        $region42: #{tpu_custom_call.1} parent=31 // pred_check_branch
          %354 = sbr.rel (%p352) target = $region44
        $region43: #{tpu_custom_call.1} parent=31 // pred_region
          %s356 = ssub.s32 512, 512
          %357 = vsyncadd %s348, %s356
          %s358 = smul.addr %s25, 8
          %s359 = sadd.s32 %s26, %s358
          %s360 = smul.addr %s359, 128
          %s361 = scalar_lea.hbm %s3, %s360
          %s362 = sshll.u32 %s351, 4
          %s363 = int_to_ptr.vmem [resolvable:$true] %s362
          %368 = dma.vmem_to_hbm [thread:$0]  %s363, 512, %s361, %s348, 128, 256, 8
        $region44: #{tpu_custom_call.1} parent=31 // pred_fallthru
          _
      $region32: #{tpu_custom_call.1} parent=5 // pred_fallthru
        _
      %p369 = scmp.le.s32.totalorder 2, %s16
      // Predicated region
      $region45: #{tpu_custom_call.1} parent=5 // pred_check
        %p370 = pneg %p369
      $region46: #{tpu_custom_call.1} parent=5 // pred_check_branch
        %372 = sbr.rel (%p370) target = $region48
      $region47: #{tpu_custom_call.1} parent=5 // pred_region
        %s373 = ssub.s32 %s16, 2
        // Predicated region
        $region49: #{tpu_custom_call.1} parent=47 // pred_check
          %p374 = pneg %p129
        $region50: #{tpu_custom_call.1} parent=47 // pred_check_branch
          %376 = sbr.rel (%p374) target = $region52
        $region51: #{tpu_custom_call.1} parent=47 // pred_region
          %s377 = sand.u32 %s114, 1
          %s378 = scalar_lea.sflag [#allocation4], %s377
          %s379 = sand.u32 %s114, 1
          %s380 = smul.addr %s379, 32
          %s381 = scalar_lea.vmem [#allocation7], %s380
          %382 = dma.done %s378, 512
        $region52: #{tpu_custom_call.1} parent=47 // pred_fallthru
          _
      $region48: #{tpu_custom_call.1} parent=5 // pred_fallthru
        _
    $region6: #{tpu_custom_call.1} parent=1 // loop_footer
      %s20 = sadd.s32 1, %s16
    $region7: #{tpu_custom_call.1} parent=1 // loop_footer_branch
      %15 = sbr.rel target = $region3
    $region8: #{tpu_custom_call.1} parent=1 // loop_exit
      _
    %383 = vsyncpa [#allocation3], 1
    %s384 = scalar_lea.sflag [#allocation3], 1
    %385 = vsyncpa %s384, 1
    %386 = vsyncpa [#allocation6], 1
    %387 = vsyncpa [#allocation4], 1
    %s388 = scalar_lea.sflag [#allocation4], 1
    %389 = vsyncpa %s388, 1

</llo_original>
